<compile_context>
chip_gen: v7x
topology: tpu7x:2x2x1
jax: 0.10.0
libtpu: 0.0.40
codegen_flags: <defaults>
</compile_context>

<pallas_src>
import functools

import jax
import jax.numpy as jnp
import numpy as np
from jax.experimental import pallas as pl
from jax.experimental.pallas import tpu as pltpu

_LANE = 128
_SUBLANE = 8


def _comm_matmul_kernel(x_ref, w1a_ref, w1b_ref, w2t_ref, o_ref):
    x = x_ref[...]                                                   # [TB, d_in]
    # Two small dots instead of one dot + lane-offset slice.
    y1 = jnp.dot(x, w1a_ref[...], preferred_element_type=jnp.float32)  # [TB, r]
    y2 = jnp.dot(x, w1b_ref[...], preferred_element_type=jnp.float32)  # [TB, r]
    z = y1 * y2                                                      # VPU elementwise
    # Lane-dense output slab (n_pad multiple of 128) -> unmasked stores.
    o_ref[...] = jnp.dot(z, w2t_ref[...],
                         preferred_element_type=jnp.float32).astype(o_ref.dtype)


def prepare_params(w1, w2, r):
    """One-time weight prep (kept OUT of the per-call path).

    w1: [2r, d_in]  (PyTorch Linear layout)   -> W1aT, W1bT: [d_in, r]
    w2: [n_p, r]    (PyTorch Linear layout)   -> W2T padded: [r, n_pad] (n_pad % 128 == 0)
    """
    n_p = w2.shape[0]
    n_pad = ((n_p + _LANE - 1) // _LANE) * _LANE
    w1t = jnp.asarray(w1).T            # [d_in, 2r]
    w1a_t = w1t[:, :r]                 # [d_in, r]
    w1b_t = w1t[:, r:]                 # [d_in, r]
    w2t = jnp.asarray(w2).T            # [r, n_p]
    w2t_pad = jnp.pad(w2t, ((0, 0), (0, n_pad - n_p)))  # zero columns -> zero output
    return w1a_t, w1b_t, w2t_pad


@functools.partial(jax.jit, static_argnames=("n_p", "tile_b"))
def comm_matmul_forward(x, w1a_t, w1b_t, w2t_pad, *, n_p, tile_b=None):
    """x: [B, n*m + m*p] fp32. Returns [B, n*p]."""
    B, d_in = x.shape
    r = w1a_t.shape[1]
    n_pad = w2t_pad.shape[1]

    # Batch tile: big enough to amortize the ~0.35us/step overhead at real batch
    # sizes (512 rows * 32 feats * 4B = 64 KiB per x tile, tiny in VMEM on all of
    # v5e/v6e/v7x), clamped/padded for small batches.
    if tile_b is None:
        tile_b = 512 if B >= 512 else max(_SUBLANE, -(-B // _SUBLANE) * _SUBLANE)
    b_pad = -(-B // tile_b) * tile_b
    if b_pad != B:
        x = jnp.pad(x, ((0, b_pad - B), (0, 0)))
    num_tiles = b_pad // tile_b

    out_pad = pl.pallas_call(
        _comm_matmul_kernel,
        out_shape=jax.ShapeDtypeStruct((b_pad, n_pad), x.dtype),
        grid_spec=pl.GridSpec(
            grid=(num_tiles,),
            in_specs=[
                # x: streamed per batch tile.
                pl.BlockSpec((tile_b, d_in), lambda i: (i, 0)),
                # Weights: constant index_map -> loaded once, VMEM-resident.
                pl.BlockSpec((d_in, r), lambda i: (0, 0)),
                pl.BlockSpec((d_in, r), lambda i: (0, 0)),
                pl.BlockSpec((r, n_pad), lambda i: (0, 0)),
            ],
            out_specs=pl.BlockSpec((tile_b, n_pad), lambda i: (i, 0)),
        ),
        compiler_params=pltpu.CompilerParams(
            dimension_semantics=("parallel",)),  # shards batch tiles over v7x's 2 TCs
    )(x, w1a_t, w1b_t, w2t_pad)

    # Slice away batch/lane padding outside the kernel (keeps in-kernel stores dense).
    return out_pad[:B, :n_p]


if __name__ == "__main__":
    # Problem sizes implied by CommMatmulModel(n, m, p, r)
    n, m, p, r = 4, 4, 4, 8
    B = 64                       # small batch; exercises 4 grid steps with tile_b=16
    d_in = n * m + m * p         # 32
    d_out = n * p                # 16

    key = jax.random.PRNGKey(0)
    k_x, k_w1, k_w2 = jax.random.split(key, 3)

    # PyTorch-Linear-style init: U(-1/sqrt(fan_in), 1/sqrt(fan_in))
    bound1 = 1.0 / np.sqrt(d_in)
    bound2 = 1.0 / np.sqrt(r)
    w1 = jax.random.uniform(k_w1, (2 * r, d_in), jnp.float32, -bound1, bound1)
    w2 = jax.random.uniform(k_w2, (d_out, r), jnp.float32, -bound2, bound2)
    x = jax.random.normal(k_x, (B, d_in), jnp.float32)

    # One-time parameter prep (transposes/split/padding NOT in the per-call path).
    w1a_t, w1b_t, w2t_pad = prepare_params(w1, w2, r)

    out = comm_matmul_forward(x, w1a_t, w1b_t, w2t_pad, n_p=d_out, tile_b=16)
    out = jax.block_until_ready(out)

    # Pure-JAX reference
    y_ref = x @ w1.T
    z_ref = y_ref[:, :r] * y_ref[:, r:]
    ref = z_ref @ w2.T
    np.testing.assert_allclose(np.asarray(out), np.asarray(ref),
                               rtol=1e-5, atol=1e-5)

    print("KERNEL_OK")
</pallas_src>

<mosaic_0001>
module attributes {stable_mosaic.version = 11 : i64} {
  func.func @_comm_matmul_kernel(%arg0: i32, %arg1: memref<16x32xf32, #tpu.memory_space<vmem>>, %arg2: memref<32x8xf32, #tpu.memory_space<vmem>>, %arg3: memref<32x8xf32, #tpu.memory_space<vmem>>, %arg4: memref<8x128xf32, #tpu.memory_space<vmem>>, %arg5: memref<16x128xf32, #tpu.memory_space<vmem>>) attributes {dimension_semantics = [#tpu.dimension_semantics<parallel>], iteration_bounds = array<i64: 4>, scalar_prefetch = 0 : i64, scratch_operands = 0 : i64, tpu.core_type = #tpu.core_type<tc>, window_params = [{transform_indices = @transform_0, window_bounds = array<i64: 16, 32>}, {pipeline_mode = #tpu.pipeline_mode<synchronous>, transform_indices = @transform_1, window_bounds = array<i64: 32, 8>}, {pipeline_mode = #tpu.pipeline_mode<synchronous>, transform_indices = @transform_2, window_bounds = array<i64: 32, 8>}, {pipeline_mode = #tpu.pipeline_mode<synchronous>, transform_indices = @transform_3, window_bounds = array<i64: 8, 128>}, {transform_indices = @transform_4, window_bounds = array<i64: 16, 128>}]} {
    %c0 = arith.constant 0 : index
    %c0_0 = arith.constant 0 : index
    %0 = vector.load %arg1[%c0, %c0_0] : memref<16x32xf32, #tpu.memory_space<vmem>>, vector<16x32xf32>
    %c0_1 = arith.constant 0 : index
    %c0_2 = arith.constant 0 : index
    %1 = vector.load %arg2[%c0_1, %c0_2] : memref<32x8xf32, #tpu.memory_space<vmem>>, vector<32x8xf32>
    %cst = arith.constant dense<0.000000e+00> : vector<16x8xf32>
    %2 = tpu.matmul %0, %1, %cst {dimension_numbers = #tpu.dot_dimension_numbers<[1], [0], [0], [1], [0, 0, 1, 1], [], []>} : vector<16x32xf32>, vector<32x8xf32>, vector<16x8xf32> -> vector<16x8xf32>
    %c0_3 = arith.constant 0 : index
    %c0_4 = arith.constant 0 : index
    %3 = vector.load %arg3[%c0_3, %c0_4] : memref<32x8xf32, #tpu.memory_space<vmem>>, vector<32x8xf32>
    %cst_5 = arith.constant dense<0.000000e+00> : vector<16x8xf32>
    %4 = tpu.matmul %0, %3, %cst_5 {dimension_numbers = #tpu.dot_dimension_numbers<[1], [0], [0], [1], [0, 0, 1, 1], [], []>} : vector<16x32xf32>, vector<32x8xf32>, vector<16x8xf32> -> vector<16x8xf32>
    %5 = arith.mulf %2, %4 : vector<16x8xf32>
    %c0_6 = arith.constant 0 : index
    %c0_7 = arith.constant 0 : index
    %6 = vector.load %arg4[%c0_6, %c0_7] : memref<8x128xf32, #tpu.memory_space<vmem>>, vector<8x128xf32>
    %cst_8 = arith.constant dense<0.000000e+00> : vector<16x128xf32>
    %7 = tpu.matmul %5, %6, %cst_8 {dimension_numbers = #tpu.dot_dimension_numbers<[1], [0], [0], [1], [0, 0, 1, 1], [], []>} : vector<16x8xf32>, vector<8x128xf32>, vector<16x128xf32> -> vector<16x128xf32>
    %c0_9 = arith.constant 0 : index
    %c0_10 = arith.constant 0 : index
    %8 = vector.load %arg5[%c0_9, %c0_10] : memref<16x128xf32, #tpu.memory_space<vmem>>, vector<16x128xf32>
    tpu.vector_store %arg5[%c0_9, %c0_10], %7 {strides = array<i32>} : memref<16x128xf32, #tpu.memory_space<vmem>>, vector<16x128xf32>,
    return
  }
  func.func @transform_0(%arg0: i32) -> (i32, i32) {
    %c0_i32 = arith.constant 0 : i32
    %c0_i32_0 = arith.constant 0 : i32
    return %arg0, %c0_i32 : i32, i32
  }
  func.func @transform_1(%arg0: i32) -> (i32, i32) {
    %c0_i32 = arith.constant 0 : i32
    %c0_i32_0 = arith.constant 0 : i32
    %c0_i32_1 = arith.constant 0 : i32
    return %c0_i32, %c0_i32_0 : i32, i32
  }
  func.func @transform_2(%arg0: i32) -> (i32, i32) {
    %c0_i32 = arith.constant 0 : i32
    %c0_i32_0 = arith.constant 0 : i32
    %c0_i32_1 = arith.constant 0 : i32
    return %c0_i32, %c0_i32_0 : i32, i32
  }
  func.func @transform_3(%arg0: i32) -> (i32, i32) {
    %c0_i32 = arith.constant 0 : i32
    %c0_i32_0 = arith.constant 0 : i32
    %c0_i32_1 = arith.constant 0 : i32
    return %c0_i32, %c0_i32_0 : i32, i32
  }
  func.func @transform_4(%arg0: i32) -> (i32, i32) {
    %c0_i32 = arith.constant 0 : i32
    %c0_i32_0 = arith.constant 0 : i32
    return %arg0, %c0_i32 : i32, i32
  }
}

</mosaic_0001>

<llo_original>
// kernel: comm_matmul_forward.1
$region0: #{comm_matmul_forward.1}
  #allocation0 [shape = 'u32[]', space=smem, size = 0x4, offset = 0x4, fixed_abs, tag = 'smem constant byte address 0x4 - core index']
  #allocation1 [shape = 'u32[144,128]{1,0:T(1,128)}', space=vmem, size = 0x12000, scoped, tag = 'internal scratch']
  %s0 = inlined_call_operand.vmem [shape: f32[64,32], index: 0, kind: input, shape index: {}]
  %s1 = inlined_call_operand.vmem [shape: f32[32,8], index: 1, kind: input, shape index: {}]
  %s2 = inlined_call_operand.vmem [shape: f32[32,8], index: 2, kind: input, shape index: {}]
  %s3 = inlined_call_operand.vmem [shape: f32[8,128], index: 3, kind: input, shape index: {}]
  %s4 = inlined_call_operand.vmem [shape: f32[64,128], index: 4, kind: output, shape index: {}]
  %s5 = sld [smem:[#allocation0]]
  $region49: #{comm_matmul_forward.1} parent=0
    _
  %s7 = ssub.s32 1, %s5
  %s8 = scalar_select 0, %s7, %s5
  loop: start=0, step=1, limit=6
  $region2: #{comm_matmul_forward.1} parent=0 // loop_pre_header
    _
  $region3: #{comm_matmul_forward.1} parent=0 // loop_header
    %s10 = sphi 0, %s14
    %p11 = scmp.ge.s32.totalorder %s10, 6
    %s20 = sphi 0, %s22
    %s23 = sphi 0, %s20
    %s24 = sphi 0, %s23
    %s40 = sphi 0, %s24
    %s44 = sphi 0, %s44
    %s46 = sphi 0, %s44
    %s47 = sphi 0, %s46
    %s61 = sphi 0, %s47
    %s65 = sphi 0, %s65
    %s67 = sphi 0, %s65
    %s68 = sphi 0, %s67
    %s82 = sphi 0, %s68
    %s86 = sphi 0, %s86
    %s88 = sphi 0, %s86
    %s89 = sphi 0, %s88
    %s103 = sphi 0, %s89
    %s109 = sphi 0, %s111
    %s112 = sphi 0, %s109
    %s113 = sphi 0, %s112
    %s129 = sphi 0, %s113
  $region4: #{comm_matmul_forward.1} parent=0 // loop_header_branch
    %13 = sbr.rel (%p11) target = $region8
  $region5: #{comm_matmul_forward.1} parent=0 // loop_body
    %s15 = ssub.s32 %s10, 1
    %s16 = ssub.s32 %s10, 2
    %s17 = sadd.s32 %s10, 1
    %s18 = ssub.s32 %s10, %s17
    %p19 = scmp.eq.s32.totalorder %s18, 0
    %s21 = sadd.s32 %s20, 1
    %s22 = scalar_select %p19, %s20, %s21
    %p25 = pneg %p19
    %p26 = scmp.eq.s32.totalorder %s10, 3
    %p27 = por %p25, %p26
    %p28 = scmp.ne.s32.totalorder %s20, %s23
    %p29 = scmp.eq.s32.totalorder %s10, 0
    %p30 = por %p28, %p29
    %p31 = scmp.ne.s32.totalorder %s20, %s23
    %p32 = scmp.eq.s32.totalorder %s15, 3
    %p33 = por %p31, %p32
    %p34 = scmp.ne.s32.totalorder %s23, %s24
    %p35 = scmp.eq.s32.totalorder %s15, 0
    %p36 = por %p34, %p35
    %p37 = scmp.ne.s32.totalorder %s23, %s24
    %p38 = scmp.eq.s32.totalorder %s16, 3
    %p39 = por %p37, %p38
    %p41 = scmp.ne.s32.totalorder %s24, %s40
    %p42 = scmp.eq.s32.totalorder %s16, 0
    %p43 = por %p41, %p42
    %s45 = sadd.s32 %s44, 1
    %p48 = scmp.eq.s32.totalorder %s10, 3
    %p49 = scmp.ne.s32.totalorder %s44, %s46
    %p50 = scmp.eq.s32.totalorder %s10, 0
    %p51 = por %p49, %p50
    %p52 = scmp.ne.s32.totalorder %s44, %s46
    %p53 = scmp.eq.s32.totalorder %s15, 3
    %p54 = por %p52, %p53
    %p55 = scmp.ne.s32.totalorder %s46, %s47
    %p56 = scmp.eq.s32.totalorder %s15, 0
    %p57 = por %p55, %p56
    %p58 = scmp.ne.s32.totalorder %s46, %s47
    %p59 = scmp.eq.s32.totalorder %s16, 3
    %p60 = por %p58, %p59
    %p62 = scmp.ne.s32.totalorder %s47, %s61
    %p63 = scmp.eq.s32.totalorder %s16, 0
    %p64 = por %p62, %p63
    %s66 = sadd.s32 %s65, 1
    %p69 = scmp.eq.s32.totalorder %s10, 3
    %p70 = scmp.ne.s32.totalorder %s65, %s67
    %p71 = scmp.eq.s32.totalorder %s10, 0
    %p72 = por %p70, %p71
    %p73 = scmp.ne.s32.totalorder %s65, %s67
    %p74 = scmp.eq.s32.totalorder %s15, 3
    %p75 = por %p73, %p74
    %p76 = scmp.ne.s32.totalorder %s67, %s68
    %p77 = scmp.eq.s32.totalorder %s15, 0
    %p78 = por %p76, %p77
    %p79 = scmp.ne.s32.totalorder %s67, %s68
    %p80 = scmp.eq.s32.totalorder %s16, 3
    %p81 = por %p79, %p80
    %p83 = scmp.ne.s32.totalorder %s68, %s82
    %p84 = scmp.eq.s32.totalorder %s16, 0
    %p85 = por %p83, %p84
    %s87 = sadd.s32 %s86, 1
    %p90 = scmp.eq.s32.totalorder %s10, 3
    %p91 = scmp.ne.s32.totalorder %s86, %s88
    %p92 = scmp.eq.s32.totalorder %s10, 0
    %p93 = por %p91, %p92
    %p94 = scmp.ne.s32.totalorder %s86, %s88
    %p95 = scmp.eq.s32.totalorder %s15, 3
    %p96 = por %p94, %p95
    %p97 = scmp.ne.s32.totalorder %s88, %s89
    %p98 = scmp.eq.s32.totalorder %s15, 0
    %p99 = por %p97, %p98
    %p100 = scmp.ne.s32.totalorder %s88, %s89
    %p101 = scmp.eq.s32.totalorder %s16, 3
    %p102 = por %p100, %p101
    %p104 = scmp.ne.s32.totalorder %s89, %s103
    %p105 = scmp.eq.s32.totalorder %s16, 0
    %p106 = por %p104, %p105
    %s107 = ssub.s32 %s10, %s17
    %p108 = scmp.eq.s32.totalorder %s107, 0
    %s110 = sadd.s32 %s109, 1
    %s111 = scalar_select %p108, %s109, %s110
    %p114 = pneg %p108
    %p115 = scmp.eq.s32.totalorder %s10, 3
    %p116 = por %p114, %p115
    %p117 = scmp.ne.s32.totalorder %s109, %s112
    %p118 = scmp.eq.s32.totalorder %s10, 0
    %p119 = por %p117, %p118
    %p120 = scmp.ne.s32.totalorder %s109, %s112
    %p121 = scmp.eq.s32.totalorder %s15, 3
    %p122 = por %p120, %p121
    %p123 = scmp.ne.s32.totalorder %s112, %s113
    %p124 = scmp.eq.s32.totalorder %s15, 0
    %p125 = por %p123, %p124
    %p126 = scmp.ne.s32.totalorder %s112, %s113
    %p127 = scmp.eq.s32.totalorder %s16, 3
    %p128 = por %p126, %p127
    %p130 = scmp.ne.s32.totalorder %s113, %s129
    %p131 = scmp.eq.s32.totalorder %s16, 0
    %p132 = por %p130, %p131
    %p133 = scmp.le.s32.totalorder 1, %s10
    %p134 = scmp.lt.s32.totalorder %s10, 5
    %p135 = pnand %p133, %p134
    %p136 = pneg %p135
    // Predicated region
    $region9: #{comm_matmul_forward.1} parent=5 // pred_check
      _
    $region10: #{comm_matmul_forward.1} parent=5 // pred_check_branch
      %138 = sbr.rel (%p135) target = $region12
    $region11: #{comm_matmul_forward.1} parent=5 // pred_region
      %s139 = ssub.s32 %s10, 1
      // Predicated region
      $region13: #{comm_matmul_forward.1} parent=11 // pred_check
        %p140 = pneg %p57
      $region14: #{comm_matmul_forward.1} parent=11 // pred_check_branch
        %142 = sbr.rel (%p140) target = $region16
      $region15: #{comm_matmul_forward.1} parent=11 // pred_region
        _
      $region16: #{comm_matmul_forward.1} parent=11 // pred_fallthru
        _
      // Predicated region
      $region17: #{comm_matmul_forward.1} parent=11 // pred_check
        %p143 = pneg %p78
      $region18: #{comm_matmul_forward.1} parent=11 // pred_check_branch
        %145 = sbr.rel (%p143) target = $region20
      $region19: #{comm_matmul_forward.1} parent=11 // pred_region
        _
      $region20: #{comm_matmul_forward.1} parent=11 // pred_fallthru
        _
      // Predicated region
      $region21: #{comm_matmul_forward.1} parent=11 // pred_check
        %p146 = pneg %p99
      $region22: #{comm_matmul_forward.1} parent=11 // pred_check_branch
        %148 = sbr.rel (%p146) target = $region24
      $region23: #{comm_matmul_forward.1} parent=11 // pred_region
        _
      $region24: #{comm_matmul_forward.1} parent=11 // pred_fallthru
        _
    $region12: #{comm_matmul_forward.1} parent=5 // pred_fallthru
      _
    %p149 = scmp.lt.s32.totalorder %s10, 4
    // Predicated region
    $region25: #{comm_matmul_forward.1} parent=5 // pred_check
      %p150 = pneg %p149
    $region26: #{comm_matmul_forward.1} parent=5 // pred_check_branch
      %152 = sbr.rel (%p150) target = $region28
    $region27: #{comm_matmul_forward.1} parent=5 // pred_region
      // Predicated region
      $region29: #{comm_matmul_forward.1} parent=27 // pred_check
        %p153 = pneg %p30
      $region30: #{comm_matmul_forward.1} parent=27 // pred_check_branch
        %155 = sbr.rel (%p153) target = $region32
      $region31: #{comm_matmul_forward.1} parent=27 // pred_region
        %s156 = smul.u32 2, %s10
        %p157 = scmp.lt.s32.totalorder %s156, 7
        %s158 = scalar_select %p157, %s156, 7
        %s159 = smul.addr %s158, 8
        %s160 = scalar_lea.vmem %s0, %s159
        %s161 = smul.u32 2, %s10
      $region32: #{comm_matmul_forward.1} parent=27 // pred_fallthru
        _
    $region28: #{comm_matmul_forward.1} parent=5 // pred_fallthru
      _
    %p162 = scmp.le.s32.totalorder 1, %s10
    %p163 = scmp.lt.s32.totalorder %s10, 5
    %p164 = pnand %p162, %p163
    %p165 = pneg %p164
    // Predicated region
    $region33: #{comm_matmul_forward.1} parent=5 // pred_check
      _
    $region34: #{comm_matmul_forward.1} parent=5 // pred_check_branch
      %167 = sbr.rel (%p164) target = $region36
    $region35: #{comm_matmul_forward.1} parent=5 // pred_region
      %s168 = ssub.s32 %s10, 1
      %s169 = smul.u32 2, %s15
      %p170 = scmp.lt.s32.totalorder %s169, 7
      %s171 = scalar_select %p170, %s169, 7
      %s172 = smul.addr %s171, 8
      %s173 = scalar_lea.vmem %s0, %s172
      %p174 = pneg %p36
      %p175 = pneg %p33
      %p176 = pneg %p57
      %p177 = pneg %p54
      %p178 = pneg %p78
      %p179 = pneg %p75
      %p180 = pneg %p99
      %p181 = pneg %p96
      %p182 = pneg %p125
      %p183 = pneg %p122
      %s184 = smul.u32 2, %s15
      %p185 = scmp.lt.s32.totalorder %s184, 7
      %s186 = scalar_select %p185, %s184, 7
      %s187 = smul.addr %s186, 8
      %s188 = scalar_lea.vmem %s4, %s187
      %s189 = smul.u32 2, %s15
      %p190 = scmp.lt.s32.totalorder %s189, 7
      %s191 = scalar_select %p190, %s189, 7
      %s192 = smul.addr %s191, 8
      %s193 = scalar_lea.vmem %s0, %s192
      %s194 = smul.u32 2, %s15
      %s195 = smul.u32 2, %s15
      %p196 = scmp.lt.s32.totalorder %s195, 7
      %s197 = scalar_select %p196, %s195, 7
      %s198 = smul.addr %s197, 8
      %s199 = scalar_lea.vmem %s4, %s198
      %s200 = smul.u32 2, %s15
      %v201 = vld [vmem:[%s193] sm:$0xff]
      %v202 = vld [vmem:[%s193 + $0x8] sm:$0xff]
      %v203 = vld [vmem:[%s1] sm:$0xff]
      %v204 = vld [vmem:[%s1 + $0x8] sm:$0xff]
      %v205 = vld [vmem:[%s1 + $0x10] sm:$0xff]
      %v206 = vld [vmem:[%s1 + $0x18] sm:$0xff]
      %vm207 = vcmask 261120
      %v209 = vsel %vm207, %v201, 0
      %v212 = vsel %vm207, %v202, 0
      %214 = vmatprep.subr.mxu0 0.0
      %215 = vmatpush1.msra.mxu0 %v203
      %216 = vmatprep.subr.mxu0 0.0
      %217 = vmatpush1.msra.mxu0 %v204
      %218 = vmatprep.subr.mxu0 0.0
      %219 = vmatpush1.msra.mxu0 %v205
      %220 = vmatprep.subr.mxu0 0.0
      %221 = vmatpush1.msra.mxu0 %v206
      %222 = vmatprep.subr.mxu0 0.0
      %223 = vmatpush1.msra.mxu0 0.0
      %224 = vmatprep.subr.mxu0 0.0
      %225 = vmatpush1.msra.mxu0 0.0
      %226 = vmatprep.subr.mxu0 0.0
      %227 = vmatpush1.msra.mxu0 0.0
      %228 = vmatprep.subr.mxu0 0.0
      %229 = vmatpush1.msra.mxu0 0.0
      %230 = vmatprep.subr.mxu0 0.0
      %231 = vmatpush1.msra.mxu0 0.0
      %232 = vmatprep.subr.mxu0 0.0
      %233 = vmatpush1.msra.mxu0 0.0
      %234 = vmatprep.subr.mxu0 0.0
      %235 = vmatpush1.msra.mxu0 0.0
      %236 = vmatprep.subr.mxu0 0.0
      %237 = vmatpush1.msra.mxu0 0.0
      %238 = vmatprep.subr.mxu0 0.0
      %239 = vmatpush1.msra.mxu0 0.0
      %240 = vmatprep.subr.mxu0 0.0
      %241 = vmatpush1.msra.mxu0 0.0
      %242 = vmatprep.subr.mxu0 0.0
      %243 = vmatpush1.msra.mxu0 0.0
      %244 = vmatprep.subr.mxu0 0.0
      %245 = vmatpush1.msra.mxu0 0.0
      %246 = vmatprep.subr.mxu0 0.0
      %247 = vmatpush1.msra.mxu0 0.0
      %248 = vmatprep.subr.mxu0 0.0
      %249 = vmatpush1.msra.mxu0 0.0
      %250 = vmatprep.subr.mxu0 0.0
      %251 = vmatpush1.msra.mxu0 0.0
      %252 = vmatprep.subr.mxu0 0.0
      %253 = vmatpush1.msra.mxu0 0.0
      %254 = vmatprep.subr.mxu0 0.0
      %255 = vmatpush1.msra.mxu0 0.0
      %256 = vmatprep.subr.mxu0 0.0
      %257 = vmatpush1.msra.mxu0 0.0
      %258 = vmatprep.subr.mxu0 0.0
      %259 = vmatpush1.msra.mxu0 0.0
      %260 = vmatprep.subr.mxu0 0.0
      %261 = vmatpush1.msra.mxu0 0.0
      %262 = vmatprep.subr.mxu0 0.0
      %263 = vmatpush1.msra.mxu0 0.0
      %264 = vmatprep.subr.mxu0 0.0
      %265 = vmatpush1.msra.mxu0 0.0
      %266 = vmatprep.subr.mxu0 0.0
      %267 = vmatpush1.msra.mxu0 0.0
      %268 = vmatprep.subr.mxu0 0.0
      %269 = vmatpush1.msra.mxu0 0.0
      %270 = vmatprep.subr.mxu0 0.0
      %271 = vmatpush1.msra.mxu0 0.0
      %272 = vmatprep.subr.mxu0 0.0
      %273 = vmatpush1.msra.mxu0 0.0
      %274 = vmatprep.subr.mxu0 0.0
      %275 = vmatpush1.msra.mxu0 0.0
      %276 = vmatprep.subr.mxu0 0.0
      %277 = vmatpush1.msra.mxu0 0.0
      %278 = vmatprep.mubr.f32.mxu0 0.0
      %279 = vmatmul.mubr.f32.gmra.mrb[0].mxu0 %v209
      %v280 = vpop.f32.mrb[0].mxu0
      %v281 = vadd.f32 0.0, %v280
      %v282 = vpop.f32.mrb[0].mxu0
      %283 = vmatprep.mubr.f32.mxu0 0.0
      %284 = vmatmul.mubr.f32.gmra.mrb[0].mxu0 %v212
      %v285 = vpop.f32.mrb[0].mxu0
      %v286 = vadd.f32 0.0, %v285
      %v287 = vpop.f32.mrb[0].mxu0
      %288 = vdwg.mxu0
      %v289 = vld [vmem:[%s2] sm:$0xff]
      %v290 = vld [vmem:[%s2 + $0x8] sm:$0xff]
      %v291 = vld [vmem:[%s2 + $0x10] sm:$0xff]
      %v292 = vld [vmem:[%s2 + $0x18] sm:$0xff]
      %293 = vmatprep.subr.mxu0 0.0
      %294 = vmatpush1.msra.mxu0 %v289
      %295 = vmatprep.subr.mxu0 0.0
      %296 = vmatpush1.msra.mxu0 %v290
      %297 = vmatprep.subr.mxu0 0.0
      %298 = vmatpush1.msra.mxu0 %v291
      %299 = vmatprep.subr.mxu0 0.0
      %300 = vmatpush1.msra.mxu0 %v292
      %301 = vmatprep.subr.mxu0 0.0
      %302 = vmatpush1.msra.mxu0 0.0
      %303 = vmatprep.subr.mxu0 0.0
      %304 = vmatpush1.msra.mxu0 0.0
      %305 = vmatprep.subr.mxu0 0.0
      %306 = vmatpush1.msra.mxu0 0.0
      %307 = vmatprep.subr.mxu0 0.0
      %308 = vmatpush1.msra.mxu0 0.0
      %309 = vmatprep.subr.mxu0 0.0
      %310 = vmatpush1.msra.mxu0 0.0
      %311 = vmatprep.subr.mxu0 0.0
      %312 = vmatpush1.msra.mxu0 0.0
      %313 = vmatprep.subr.mxu0 0.0
      %314 = vmatpush1.msra.mxu0 0.0
      %315 = vmatprep.subr.mxu0 0.0
      %316 = vmatpush1.msra.mxu0 0.0
      %317 = vmatprep.subr.mxu0 0.0
      %318 = vmatpush1.msra.mxu0 0.0
      %319 = vmatprep.subr.mxu0 0.0
      %320 = vmatpush1.msra.mxu0 0.0
      %321 = vmatprep.subr.mxu0 0.0
      %322 = vmatpush1.msra.mxu0 0.0
      %323 = vmatprep.subr.mxu0 0.0
      %324 = vmatpush1.msra.mxu0 0.0
      %325 = vmatprep.subr.mxu0 0.0
      %326 = vmatpush1.msra.mxu0 0.0
      %327 = vmatprep.subr.mxu0 0.0
      %328 = vmatpush1.msra.mxu0 0.0
      %329 = vmatprep.subr.mxu0 0.0
      %330 = vmatpush1.msra.mxu0 0.0
      %331 = vmatprep.subr.mxu0 0.0
      %332 = vmatpush1.msra.mxu0 0.0
      %333 = vmatprep.subr.mxu0 0.0
      %334 = vmatpush1.msra.mxu0 0.0
      %335 = vmatprep.subr.mxu0 0.0
      %336 = vmatpush1.msra.mxu0 0.0
      %337 = vmatprep.subr.mxu0 0.0
      %338 = vmatpush1.msra.mxu0 0.0
      %339 = vmatprep.subr.mxu0 0.0
      %340 = vmatpush1.msra.mxu0 0.0
      %341 = vmatprep.subr.mxu0 0.0
      %342 = vmatpush1.msra.mxu0 0.0
      %343 = vmatprep.subr.mxu0 0.0
      %344 = vmatpush1.msra.mxu0 0.0
      %345 = vmatprep.subr.mxu0 0.0
      %346 = vmatpush1.msra.mxu0 0.0
      %347 = vmatprep.subr.mxu0 0.0
      %348 = vmatpush1.msra.mxu0 0.0
      %349 = vmatprep.subr.mxu0 0.0
      %350 = vmatpush1.msra.mxu0 0.0
      %351 = vmatprep.subr.mxu0 0.0
      %352 = vmatpush1.msra.mxu0 0.0
      %353 = vmatprep.subr.mxu0 0.0
      %354 = vmatpush1.msra.mxu0 0.0
      %355 = vmatprep.subr.mxu0 0.0
      %356 = vmatpush1.msra.mxu0 0.0
      %357 = vmatprep.mubr.f32.mxu0 0.0
      %358 = vmatmul.mubr.f32.gmra.mrb[0].mxu0 %v209
      %v359 = vpop.f32.mrb[0].mxu0
      %v360 = vadd.f32 0.0, %v359
      %v361 = vpop.f32.mrb[0].mxu0
      %362 = vmatprep.mubr.f32.mxu0 0.0
      %363 = vmatmul.mubr.f32.gmra.mrb[0].mxu0 %v212
      %v364 = vpop.f32.mrb[0].mxu0
      %v365 = vadd.f32 0.0, %v364
      %v366 = vpop.f32.mrb[0].mxu0
      %367 = vdwg.mxu0
      %v368 = vmul.f32 %v281, %v360
      %v369 = vmul.f32 %v286, %v365
      %v370 = vld [vmem:[%s3] sm:$0xff]
      %vm371 = vcmask 64512
      %v373 = vsel %vm371, %v368, 0
      %v376 = vsel %vm371, %v369, 0
      %378 = vmatprep.subr.mxu0 0.0
      %379 = vmatpush1.msra.mxu0 %v370
      %380 = vmatprep.subr.mxu0 0.0
      %381 = vmatpush1.msra.mxu0 0.0
      %382 = vmatprep.subr.mxu0 0.0
      %383 = vmatpush1.msra.mxu0 0.0
      %384 = vmatprep.subr.mxu0 0.0
      %385 = vmatpush1.msra.mxu0 0.0
      %386 = vmatprep.subr.mxu0 0.0
      %387 = vmatpush1.msra.mxu0 0.0
      %388 = vmatprep.subr.mxu0 0.0
      %389 = vmatpush1.msra.mxu0 0.0
      %390 = vmatprep.subr.mxu0 0.0
      %391 = vmatpush1.msra.mxu0 0.0
      %392 = vmatprep.subr.mxu0 0.0
      %393 = vmatpush1.msra.mxu0 0.0
      %394 = vmatprep.subr.mxu0 0.0
      %395 = vmatpush1.msra.mxu0 0.0
      %396 = vmatprep.subr.mxu0 0.0
      %397 = vmatpush1.msra.mxu0 0.0
      %398 = vmatprep.subr.mxu0 0.0
      %399 = vmatpush1.msra.mxu0 0.0
      %400 = vmatprep.subr.mxu0 0.0
      %401 = vmatpush1.msra.mxu0 0.0
      %402 = vmatprep.subr.mxu0 0.0
      %403 = vmatpush1.msra.mxu0 0.0
      %404 = vmatprep.subr.mxu0 0.0
      %405 = vmatpush1.msra.mxu0 0.0
      %406 = vmatprep.subr.mxu0 0.0
      %407 = vmatpush1.msra.mxu0 0.0
      %408 = vmatprep.subr.mxu0 0.0
      %409 = vmatpush1.msra.mxu0 0.0
      %410 = vmatprep.subr.mxu0 0.0
      %411 = vmatpush1.msra.mxu0 0.0
      %412 = vmatprep.subr.mxu0 0.0
      %413 = vmatpush1.msra.mxu0 0.0
      %414 = vmatprep.subr.mxu0 0.0
      %415 = vmatpush1.msra.mxu0 0.0
      %416 = vmatprep.subr.mxu0 0.0
      %417 = vmatpush1.msra.mxu0 0.0
      %418 = vmatprep.subr.mxu0 0.0
      %419 = vmatpush1.msra.mxu0 0.0
      %420 = vmatprep.subr.mxu0 0.0
      %421 = vmatpush1.msra.mxu0 0.0
      %422 = vmatprep.subr.mxu0 0.0
      %423 = vmatpush1.msra.mxu0 0.0
      %424 = vmatprep.subr.mxu0 0.0
      %425 = vmatpush1.msra.mxu0 0.0
      %426 = vmatprep.subr.mxu0 0.0
      %427 = vmatpush1.msra.mxu0 0.0
      %428 = vmatprep.subr.mxu0 0.0
      %429 = vmatpush1.msra.mxu0 0.0
      %430 = vmatprep.subr.mxu0 0.0
      %431 = vmatpush1.msra.mxu0 0.0
      %432 = vmatprep.subr.mxu0 0.0
      %433 = vmatpush1.msra.mxu0 0.0
      %434 = vmatprep.subr.mxu0 0.0
      %435 = vmatpush1.msra.mxu0 0.0
      %436 = vmatprep.subr.mxu0 0.0
      %437 = vmatpush1.msra.mxu0 0.0
      %438 = vmatprep.subr.mxu0 0.0
      %439 = vmatpush1.msra.mxu0 0.0
      %440 = vmatprep.subr.mxu0 0.0
      %441 = vmatpush1.msra.mxu0 0.0
      %442 = vmatprep.mubr.f32.mxu0 0.0
      %443 = vmatmul.mubr.f32.gmra.mrb[0].mxu0 %v373
      %v444 = vpop.f32.mrb[0].mxu0
      %v445 = vadd.f32 0.0, %v444
      %v446 = vpop.f32.mrb[0].mxu0
      %447 = vmatprep.mubr.f32.mxu0 0.0
      %448 = vmatmul.mubr.f32.gmra.mrb[0].mxu0 %v376
      %v449 = vpop.f32.mrb[0].mxu0
      %v450 = vadd.f32 0.0, %v449
      %v451 = vpop.f32.mrb[0].mxu0
      %452 = vdwg.mxu0
      %453 = vst [vmem:[%s199] sm:$0xff] %v445
      %454 = vst [vmem:[%s199 + $0x8] sm:$0xff] %v450
      %s455 = smul.u32 2, %s15
      %p456 = scmp.lt.s32.totalorder %s455, 7
      %s457 = scalar_select %p456, %s455, 7
      %s458 = smul.addr %s457, 8
      %s459 = scalar_lea.vmem %s4, %s458
      // Predicated region
      $region37: #{comm_matmul_forward.1} parent=35 // pred_check
        %p460 = pneg %p122
      $region38: #{comm_matmul_forward.1} parent=35 // pred_check_branch
        %462 = sbr.rel (%p460) target = $region40
      $region39: #{comm_matmul_forward.1} parent=35 // pred_region
        %s463 = smul.u32 2, %s15
      $region40: #{comm_matmul_forward.1} parent=35 // pred_fallthru
        _
    $region36: #{comm_matmul_forward.1} parent=5 // pred_fallthru
      _
    %p464 = scmp.le.s32.totalorder 2, %s10
    // Predicated region
    $region41: #{comm_matmul_forward.1} parent=5 // pred_check
      %p465 = pneg %p464
    $region42: #{comm_matmul_forward.1} parent=5 // pred_check_branch
      %467 = sbr.rel (%p465) target = $region44
    $region43: #{comm_matmul_forward.1} parent=5 // pred_region
      %s468 = ssub.s32 %s10, 2
      // Predicated region
      $region45: #{comm_matmul_forward.1} parent=43 // pred_check
        %p469 = pneg %p128
      $region46: #{comm_matmul_forward.1} parent=43 // pred_check_branch
        %471 = sbr.rel (%p469) target = $region48
      $region47: #{comm_matmul_forward.1} parent=43 // pred_region
        %s472 = smul.u32 2, %s16
        %p473 = scmp.lt.s32.totalorder %s472, 7
        %s474 = scalar_select %p473, %s472, 7
        %s475 = smul.addr %s474, 8
        %s476 = scalar_lea.vmem %s4, %s475
      $region48: #{comm_matmul_forward.1} parent=43 // pred_fallthru
        _
    $region44: #{comm_matmul_forward.1} parent=5 // pred_fallthru
      _
  $region6: #{comm_matmul_forward.1} parent=0 // loop_footer
    %s14 = sadd.s32 1, %s10
  $region7: #{comm_matmul_forward.1} parent=0 // loop_footer_branch
    %9 = sbr.rel target = $region3
  $region8: #{comm_matmul_forward.1} parent=0 // loop_exit
    _

</llo_original>
